<compile_context>
chip_gen: v7x
topology: tpu7x:2x2x1
jax: 0.10.0
libtpu: 0.0.40
codegen_flags: <defaults>
</compile_context>

<pallas_src>
import functools
import math

import jax
import jax.numpy as jnp
from jax import lax
from jax.experimental import pallas as pl
from jax.experimental.pallas import tpu as pltpu


# ----------------------------------------------------------------------------
# Kernel 1: fused temporal MLP chain with stacked first-layer weights.
# grid = (B, L2, N2 // n2_tile); native (B, L2, C, N) layout in and out.
# ----------------------------------------------------------------------------
def _temporal_mlp_kernel(*refs, n_layers, relus, T, chans):
    # refs = [x, w0_stacked, scale0_stacked, shift0_stacked,
    #         (w, scale, shift) for layers 1..n-1, o]
    x_ref = refs[0]
    o_ref = refs[-1]

    # Layer 0: one big stacked matmul (T*C1, Cin) @ (Cin, n2_tile).
    y = jnp.dot(refs[1][...], x_ref[...], preferred_element_type=jnp.float32)
    y = y * refs[2][...] + refs[3][...]
    if relus[0]:
        y = jnp.maximum(y, 0.0)

    # Layers > 0: per-displacement matmuls on in-register slices (T is small).
    idx = 4
    for i in range(1, n_layers):
        w_ref, s_ref, b_ref = refs[idx], refs[idx + 1], refs[idx + 2]
        idx += 3
        c_prev = chans[i - 1]
        outs = []
        for t in range(T):
            yt = y[t * c_prev:(t + 1) * c_prev, :]
            zt = jnp.dot(w_ref[t], yt, preferred_element_type=jnp.float32)
            zt = zt * s_ref[t] + b_ref[t]
            if relus[i]:
                zt = jnp.maximum(zt, 0.0)
            outs.append(zt)
        y = jnp.concatenate(outs, axis=0)

    o_ref[...] = y


def temporal_mlps_apply(features, temporal_layers, T):
    """features: (B, L2, Cin, N2) in the module's native layout.
    temporal_layers[i]: 'w' (T, Co, Ci), 'scale'/'shift' (T, Co, 1), 'relu' bool.
    Returns (B, L2, T*Ct, N2)."""
    B, L2, Cin, N2 = features.shape
    n_layers = len(temporal_layers)
    chans = [l['w'].shape[1] for l in temporal_layers]
    Ct = chans[-1]
    relus = tuple(bool(l['relu']) for l in temporal_layers)

    # Stack the T displacement weights of the first layer along output channels.
    w0 = temporal_layers[0]['w'].reshape(T * chans[0], Cin)
    s0 = temporal_layers[0]['scale'].reshape(T * chans[0], 1)
    b0 = temporal_layers[0]['shift'].reshape(T * chans[0], 1)

    # Point-axis tiling (matters on v7x's 64 MiB VMEM at production N2).
    n2_tile = N2
    for cand in (2048, 1024, 512):
        if N2 % cand == 0:
            n2_tile = cand
            break
    grid = (B, L2, N2 // n2_tile)

    in_specs = [
        pl.BlockSpec((None, None, Cin, n2_tile), lambda b, f, p: (b, f, 0, p)),
        pl.BlockSpec((T * chans[0], Cin), lambda b, f, p: (0, 0)),
        pl.BlockSpec((T * chans[0], 1), lambda b, f, p: (0, 0)),
        pl.BlockSpec((T * chans[0], 1), lambda b, f, p: (0, 0)),
    ]
    args = [features, w0, s0, b0]
    for i in range(1, n_layers):
        lyr = temporal_layers[i]
        Co, Ci = chans[i], chans[i - 1]
        in_specs += [pl.BlockSpec((T, Co, Ci), lambda b, f, p: (0, 0, 0)),
                     pl.BlockSpec((T, Co, 1), lambda b, f, p: (0, 0, 0)),
                     pl.BlockSpec((T, Co, 1), lambda b, f, p: (0, 0, 0))]
        args += [lyr['w'], lyr['scale'], lyr['shift']]

    kern = functools.partial(_temporal_mlp_kernel, n_layers=n_layers,
                             relus=relus, T=T, chans=tuple(chans))
    return pl.pallas_call(
        kern,
        out_shape=jax.ShapeDtypeStruct((B, L2, T * Ct, N2), jnp.float32),
        grid=grid,
        in_specs=in_specs,
        out_specs=pl.BlockSpec((None, None, T * Ct, n2_tile),
                               lambda b, f, p: (b, f, 0, p)),
        compiler_params=pltpu.CompilerParams(
            dimension_semantics=("parallel", "parallel", "parallel"),
            vmem_limit_bytes=32 * 1024 * 1024),
    )(*args)


def _ref_temporal_mlps(features, temporal_layers, T):
    """Pure-JAX reference of the temporal phase.  Returns (B, L2, T, Ct, N2)."""
    outs = []
    for t in range(T):
        y = features
        for lyr in temporal_layers:
            y = jnp.einsum('oc,blcn->blon', lyr['w'][t], y)
            y = y * lyr['scale'][t][None, None] + lyr['shift'][t][None, None]
            if lyr['relu']:
                y = jnp.maximum(y, 0.0)
        outs.append(y)
    return jnp.stack(outs, axis=2)


# ----------------------------------------------------------------------------
# Shared math for kernel 2 and its pure-JAX reference:
# VPU pairwise distances, 3-NN as a dense row-normalised weight matrix, MXU
# interpolation, split-weight skip concat, spatial MLP.
# ----------------------------------------------------------------------------
def _three_nn_interp_spatial(a, seed_xyz, seed_feat, penalties, ofeat,
                             layer_vals, relus):
    """a: (N1, 3); seed_xyz: list of (3, N2); seed_feat: list of (Ct, N2);
    penalties: list of scalar f32 (0 for real seeds, 1e9 for padded slots);
    ofeat: (Corig, N1) or None.  Returns (Cout, N1)."""
    N1 = a.shape[0]
    N2 = seed_xyz[0].shape[1]
    K = len(seed_xyz)
    M = K * N2

    # Exact f32 squared distances on the VPU (matches pointnet2's (a-b)^2 form;
    # no catastrophic cancellation, MXU stays free for the matmuls below).
    dists = []
    for k in range(K):
        bx = seed_xyz[k]
        dk = jnp.zeros((N1, N2), jnp.float32)
        for c in range(3):
            diff = a[:, c:c + 1] - bx[c:c + 1, :]
            dk = dk + diff * diff
        dists.append(dk + penalties[k])
    d = jnp.concatenate(dists, axis=1)                    # (N1, M)
    feat = jnp.concatenate(seed_feat, axis=1)             # (Ct, M)

    # 3-NN: one-hot selections folded directly into the weight matrix.
    iota = lax.broadcasted_iota(jnp.int32, (N1, M), 1)
    dd = d
    wmat = jnp.zeros((N1, M), jnp.float32)
    norm = jnp.zeros((N1, 1), jnp.float32)
    for _ in range(3):  # first-index tie-break, like pointnet2's three_nn
        dmin = jnp.min(dd, axis=-1, keepdims=True)        # (N1, 1)
        sel = jnp.min(jnp.where(dd == dmin, iota, M), axis=-1, keepdims=True)
        oh = iota == sel                                  # (N1, M)
        recip = 1.0 / (jnp.sqrt(dmin) + 1e-8)             # 1/(dist + 1e-8)
        wmat = wmat + jnp.where(oh, recip, 0.0)
        norm = norm + recip
        dd = jnp.where(oh, jnp.float32(jnp.inf), dd)
    wmat = wmat / norm

    # interpolated[c, n] = sum_m feat[c, m] * wmat[n, m]  (MXU matmul)
    dn = (((1,), (1,)), ((), ()))
    interp = lax.dot_general(feat, wmat, dn,
                             preferred_element_type=jnp.float32)   # (Ct, N1)

    if not layer_vals:
        if ofeat is None:
            return interp
        return jnp.concatenate([interp, ofeat], axis=0)

    # First spatial layer: channel concat realised by splitting the weight.
    if ofeat is not None:
        w_i, w_o, scale, shift = layer_vals[0]
        y = (jnp.dot(w_i, interp, preferred_element_type=jnp.float32)
             + jnp.dot(w_o, ofeat, preferred_element_type=jnp.float32))
    else:
        w, scale, shift = layer_vals[0]
        y = jnp.dot(w, interp, preferred_element_type=jnp.float32)
    y = y * scale + shift
    if relus[0]:
        y = jnp.maximum(y, 0.0)

    for li in range(1, len(layer_vals)):
        w, scale, shift = layer_vals[li]
        y = jnp.dot(w, y, preferred_element_type=jnp.float32)
        y = y * scale + shift
        if relus[li]:
            y = jnp.maximum(y, 0.0)
    return y


def _spatial_layer_arrays(spatial_layers, Ct, has_orig):
    vals = []
    for i, lyr in enumerate(spatial_layers):
        if i == 0 and has_orig:
            vals.append((lyr['w'][:, :Ct], lyr['w'][:, Ct:],
                         lyr['scale'], lyr['shift']))
        else:
            vals.append((lyr['w'], lyr['scale'], lyr['shift']))
    return vals


# ----------------------------------------------------------------------------
# Kernel 2: fused 3-NN + interpolation + skip-concat + spatial MLP.
# grid = (L1,); seed (t2, displacement) tables are scalar-prefetched and drive
# data-dependent index_maps -> no host-side neighbor-set materialization.
# ----------------------------------------------------------------------------
def _interp_spatial_kernel(t2_ref, d_ref, valid_ref, *refs, B, max_seeds,
                           n_spatial, has_orig, relus):
    idx = 0
    anchor_ref = refs[idx]; idx += 1                      # (B, N1, 3)
    orig_ref = None
    if has_orig:
        orig_ref = refs[idx]; idx += 1                    # (B, Corig, N1)
    xyz_refs = refs[idx:idx + max_seeds]; idx += max_seeds    # (B, 3, N2) each
    feat_refs = refs[idx:idx + max_seeds]; idx += max_seeds   # (B, Ct, N2) each
    layer_vals = []
    for li in range(n_spatial):
        n_params = 4 if (li == 0 and has_orig) else 3
        layer_vals.append(tuple(r[...] for r in refs[idx:idx + n_params]))
        idx += n_params
    o_ref = refs[idx]                                     # (B, Cout, N1)

    t1 = pl.program_id(0)

    # Padded seed slots get a huge distance penalty -> never selected by 3-NN.
    penalties = []
    for k in range(max_seeds):
        v = valid_ref[k, t1]
        penalties.append(jnp.where(v > 0, jnp.float32(0.0), jnp.float32(1e9)))

    # Batch folded into the grid step: L1 (not L1*B) steps, weights stay resident.
    # TODO(synk): for large B / N1 switch to lax.fori_loop over B and chunk N1.
    for b in range(B):
        a = anchor_ref[b]
        sx = [xyz_refs[k][b] for k in range(max_seeds)]
        sf = [feat_refs[k][b] for k in range(max_seeds)]
        of = orig_ref[b] if has_orig else None
        o_ref[b] = _three_nn_interp_spatial(a, sx, sf, penalties, of,
                                            layer_vals, relus)


def interp_spatial_apply(anchor_xyz, xyzT, tt5, orig_feats, spatial_layers,
                         t2_tbl, d_tbl, v_tbl):
    """anchor_xyz: (B, L1, N1, 3); xyzT: (B, L2, 3, N2); tt5: (B, L2, T, Ct, N2);
    orig_feats: (B, L1, Corig, N1) or None; tables: (max_seeds, L1) int32.
    Returns (B, L1, Cout, N1)."""
    B, L1, N1, _ = anchor_xyz.shape
    _, L2, _, N2 = xyzT.shape
    Ct = tt5.shape[3]
    max_seeds = t2_tbl.shape[0]
    has_orig = orig_feats is not None
    Corig = orig_feats.shape[2] if has_orig else 0
    n_spatial = len(spatial_layers)
    relus = tuple(bool(l['relu']) for l in spatial_layers)
    Cout = spatial_layers[-1]['w'].shape[0] if n_spatial > 0 else Ct + Corig

    layer_arrays = _spatial_layer_arrays(spatial_layers, Ct, has_orig)

    def const_map(nd):
        return lambda t1, *_: (0,) * nd

    def xyz_map(k):
        return lambda t1, t2r, dr, vr: (0, t2r[k, t1], 0, 0)

    def feat_map(k):
        return lambda t1, t2r, dr, vr: (0, t2r[k, t1], dr[k, t1], 0, 0)

    in_specs = [pl.BlockSpec((B, None, N1, 3), lambda t1, *_: (0, t1, 0, 0))]
    args = [anchor_xyz]
    if has_orig:
        in_specs.append(pl.BlockSpec((B, None, Corig, N1),
                                     lambda t1, *_: (0, t1, 0, 0)))
        args.append(orig_feats)
    for k in range(max_seeds):
        in_specs.append(pl.BlockSpec((B, None, 3, N2), xyz_map(k)))
        args.append(xyzT)
    for k in range(max_seeds):
        in_specs.append(pl.BlockSpec((B, None, None, Ct, N2), feat_map(k)))
        args.append(tt5)
    for vals in layer_arrays:
        for arr in vals:
            in_specs.append(pl.BlockSpec(arr.shape, const_map(arr.ndim)))
            args.append(arr)

    out_spec = pl.BlockSpec((B, None, Cout, N1), lambda t1, *_: (0, t1, 0, 0))

    kern = functools.partial(_interp_spatial_kernel, B=B, max_seeds=max_seeds,
                             n_spatial=n_spatial, has_orig=has_orig, relus=relus)
    return pl.pallas_call(
        kern,
        out_shape=jax.ShapeDtypeStruct((B, L1, Cout, N1), jnp.float32),
        grid_spec=pltpu.PrefetchScalarGridSpec(
            num_scalar_prefetch=3,
            grid=(L1,),
            in_specs=in_specs,
            out_specs=out_spec),
        compiler_params=pltpu.CompilerParams(
            dimension_semantics=("arbitrary",),
            vmem_limit_bytes=32 * 1024 * 1024),
    )(t2_tbl, d_tbl, v_tbl, *args)


def _ref_interp_spatial(anchor_xyz, xyzT, tt5, orig_feats, spatial_layers,
                        t2_list, d_list, v_list):
    """Pure-JAX reference of the interp/spatial phase (same math, static loops)."""
    B, L1, N1, _ = anchor_xyz.shape
    Ct = tt5.shape[3]
    max_seeds = len(t2_list)
    has_orig = orig_feats is not None
    relus = tuple(bool(l['relu']) for l in spatial_layers)
    layer_vals = _spatial_layer_arrays(spatial_layers, Ct, has_orig)

    outs_t1 = []
    for t1 in range(L1):
        pens = [jnp.float32(0.0 if v_list[k][t1] else 1e9) for k in range(max_seeds)]
        outs_b = []
        for b in range(B):
            a = anchor_xyz[b, t1]
            sx = [xyzT[b, t2_list[k][t1]] for k in range(max_seeds)]
            sf = [tt5[b, t2_list[k][t1], d_list[k][t1]] for k in range(max_seeds)]
            of = orig_feats[b, t1] if has_orig else None
            outs_b.append(_three_nn_interp_spatial(a, sx, sf, pens, of,
                                                   layer_vals, relus))
        outs_t1.append(jnp.stack(outs_b, axis=0))
    return jnp.stack(outs_t1, axis=1)                     # (B, L1, Cout, N1)


# ----------------------------------------------------------------------------
# PSTTransOp in JAX (parameters initialized deterministically in-script)
# ----------------------------------------------------------------------------
class PSTTransOpPallas:
    def __init__(self, in_channels, temporal_radius, temporal_stride, temporal_padding,
                 temporal_channels, temporal_batch_norm, temporal_activation,
                 spatial_channels, spatial_batch_norm, spatial_activation,
                 original_channels=0, bias=False, key=None):
        assert len(spatial_channels) == len(spatial_batch_norm) == len(spatial_activation)
        assert len(temporal_channels) == len(temporal_batch_norm) == len(temporal_activation)
        assert temporal_padding[0] <= 0 and temporal_padding[1] <= 0
        assert not bias  # TODO(synk): bias=True path not implemented (module default is False)

        self.in_channels = in_channels
        self.temporal_radius = temporal_radius
        self.temporal_stride = temporal_stride
        self.temporal_padding = temporal_padding
        self.temporal_channels = temporal_channels
        self.spatial_channels = spatial_channels
        self.original_channels = original_channels

        key = jax.random.PRNGKey(0) if key is None else key

        def make_layer_params(k, cin, cout, use_bn):
            kw, kg, kb, km, kv = jax.random.split(k, 5)
            bound = 1.0 / math.sqrt(cin)
            w = jax.random.uniform(kw, (cout, cin), jnp.float32, -bound, bound)
            if use_bn:
                gamma = jax.random.uniform(kg, (cout, 1), jnp.float32, 0.5, 1.5)
                beta = jax.random.uniform(kb, (cout, 1), jnp.float32, -0.5, 0.5)
                mean = jax.random.uniform(km, (cout, 1), jnp.float32, -0.1, 0.1)
                var = jax.random.uniform(kv, (cout, 1), jnp.float32, 0.8, 1.2)
                scale = gamma / jnp.sqrt(var + 1e-5)
                shift = beta - mean * scale
            else:
                scale = jnp.ones((cout, 1), jnp.float32)
                shift = jnp.zeros((cout, 1), jnp.float32)
            return w, scale, shift

        # temporal MLPs: weights of the (2r+1) displacement MLPs stacked per layer
        T = 2 * temporal_radius + 1
        self.temporal_layers = []
        for i in range(len(temporal_channels)):
            cin = in_channels if i == 0 else temporal_channels[i - 1]
            ws, ss, bs = [], [], []
            for _t in range(T):
                key, sub = jax.random.split(key)
                w, s, b = make_layer_params(sub, cin, temporal_channels[i],
                                            temporal_batch_norm[i])
                ws.append(w); ss.append(s); bs.append(b)
            self.temporal_layers.append({'w': jnp.stack(ws), 'scale': jnp.stack(ss),
                                         'shift': jnp.stack(bs),
                                         'relu': bool(temporal_activation[i])})

        # spatial MLP (BN/ReLU after every layer when the lists are non-empty,
        # matching the original module's list-truthiness check)
        self.spatial_mlp = []
        for i in range(len(spatial_channels)):
            if i == 0:
                base = temporal_channels[-1] if len(temporal_channels) > 0 else in_channels
                cin = base + original_channels
            else:
                cin = spatial_channels[i - 1]
            key, sub = jax.random.split(key)
            w, s, b = make_layer_params(sub, cin, spatial_channels[i],
                                        bool(spatial_batch_norm))
            self.spatial_mlp.append({'w': w, 'scale': s, 'shift': b,
                                     'relu': bool(spatial_activation)})

    def forward(self, xyzs, original_xyzs, features, original_features=None,
                use_pallas=True):
        B, L2, N2, _ = xyzs.shape
        L1, N1 = original_xyzs.shape[1], original_xyzs.shape[2]
        r, stride, pad = self.temporal_radius, self.temporal_stride, self.temporal_padding
        if r > 0 and stride > 1:
            assert (L2 - 1) * stride + sum(pad) + (2 * r + 1) == L1, \
                'PSTTransOp: Temporal parameter error!'
        T = 2 * r + 1
        Cin = features.shape[2]

        # ---- Phase 1: temporal MLPs in native layout (no feature transposes) ----
        if len(self.temporal_layers) > 0:
            Ct = self.temporal_layers[-1]['w'].shape[1]
            if use_pallas:
                tt = temporal_mlps_apply(features, self.temporal_layers, T)
                tt5 = tt.reshape(B, L2, T, Ct, N2)   # contiguous split: free
            else:
                tt5 = _ref_temporal_mlps(features, self.temporal_layers, T)
            T_eff = T
        else:
            Ct = Cin
            tt5 = features.reshape(B, L2, 1, Cin, N2)  # every displacement == features
            T_eff = 1

        # ---- static temporal-interpolation schedule -> scalar-prefetch tables ----
        middles, deltas = [], []
        for t2 in range(1, L2 + 1):
            middle = t2 + (t2 - 1) * (stride - 1) + r + pad[0]
            middles.append(middle)
            deltas.append(range(middle - r, middle + r + pad[1] + 1))
        seeds = []                                     # per t1: list of (t2, displacement)
        for t1 in range(1, L1 + 1):
            s = []
            for t2 in range(L2):
                if t1 in deltas[t2]:
                    s.append((t2, t1 - middles[t2] + r))
            seeds.append(s)
        max_seeds = max(len(s) for s in seeds)
        # padded-seed safety: every frame must have >= 3 real candidate neighbours
        assert min(len(s) for s in seeds) * N2 >= 3, \
            "PSTTransOp: fewer than 3 neighbor points for some frame"

        t2_list = [[0] * L1 for _ in range(max_seeds)]
        d_list = [[0] * L1 for _ in range(max_seeds)]
        v_list = [[0] * L1 for _ in range(max_seeds)]
        for t1, s in enumerate(seeds):
            for k, (t2, d) in enumerate(s):
                t2_list[k][t1] = t2
                d_list[k][t1] = d if T_eff > 1 else 0
                v_list[k][t1] = 1

        # xyz coordinate transpose only (3*N2 per frame -- negligible vs features)
        xyzT = jnp.transpose(xyzs, (0, 1, 3, 2))       # (B, L2, 3, N2)

        # ---- Phase 2: fused 3-NN interp + skip-concat + spatial MLP (one launch) ----
        if use_pallas:
            t2_tbl = jnp.asarray(t2_list, jnp.int32)
            d_tbl = jnp.asarray(d_list, jnp.int32)
            v_tbl = jnp.asarray(v_list, jnp.int32)
            out = interp_spatial_apply(original_xyzs, xyzT, tt5, original_features,
                                       self.spatial_mlp, t2_tbl, d_tbl, v_tbl)
        else:
            out = _ref_interp_spatial(original_xyzs, xyzT, tt5, original_features,
                                      self.spatial_mlp, t2_list, d_list, v_list)

        return original_xyzs, out                      # (B, L1, C", N1)


# ----------------------------------------------------------------------------
if __name__ == "__main__":
    key = jax.random.PRNGKey(0)

    # small shapes consistent with the module
    B, L2, N2, Cin = 2, 3, 16, 8
    radius, stride, padding = 1, 2, (0, 0)
    L1 = (L2 - 1) * stride + sum(padding) + (2 * radius + 1)   # 7
    N1, Corig = 32, 4
    temporal_channels = [16]
    spatial_channels = [32]

    k1, k2, k3, k4, kparam = jax.random.split(key, 5)
    xyzs = jax.random.uniform(k1, (B, L2, N2, 3), jnp.float32)
    original_xyzs = jax.random.uniform(k2, (B, L1, N1, 3), jnp.float32)
    features = jax.random.normal(k3, (B, L2, Cin, N2), jnp.float32)
    original_features = jax.random.normal(k4, (B, L1, Corig, N1), jnp.float32)

    op = PSTTransOpPallas(
        in_channels=Cin, temporal_radius=radius, temporal_stride=stride,
        temporal_padding=padding,
        temporal_channels=temporal_channels,
        temporal_batch_norm=[True], temporal_activation=[True],
        spatial_channels=spatial_channels,
        spatial_batch_norm=[True], spatial_activation=[True],
        original_channels=Corig, bias=False, key=kparam)

    new_xyzs, new_features = op.forward(xyzs, original_xyzs, features,
                                        original_features, use_pallas=True)
    jax.block_until_ready(new_features)

    assert new_xyzs.shape == (B, L1, N1, 3)
    assert new_features.shape == (B, L1, spatial_channels[-1], N1)
    assert bool(jnp.all(jnp.isfinite(new_features)))

    # sanity check against a pure-JAX reference of the same math; the 3-NN
    # selection is exact f32 in both paths so only MXU rounding differs.
    _, ref_features = op.forward(xyzs, original_xyzs, features,
                                 original_features, use_pallas=False)
    close = jnp.isclose(new_features, ref_features, rtol=2e-2, atol=2e-2)
    assert float(jnp.mean(close)) > 0.99, float(jnp.mean(close))

    print("KERNEL_OK")
</pallas_src>

<mosaic_0001>
module attributes {stable_mosaic.version = 11 : i64} {
  func.func @_temporal_mlp_kernel(%arg0: i32, %arg1: i32, %arg2: i32, %arg3: memref<1x1x8x16xf32, #tpu.memory_space<vmem>>, %arg4: memref<48x8xf32, #tpu.memory_space<vmem>>, %arg5: memref<48x1xf32, #tpu.memory_space<vmem>>, %arg6: memref<48x1xf32, #tpu.memory_space<vmem>>, %arg7: memref<1x1x48x16xf32, #tpu.memory_space<vmem>>) attributes {dimension_semantics = [#tpu.dimension_semantics<parallel>, #tpu.dimension_semantics<parallel>, #tpu.dimension_semantics<parallel>], iteration_bounds = array<i64: 2, 3, 1>, scalar_prefetch = 0 : i64, scratch_operands = 0 : i64, tpu.core_type = #tpu.core_type<tc>, window_params = [{transform_indices = @transform_0, window_bounds = array<i64: 1, 1, 8, 16>}, {pipeline_mode = #tpu.pipeline_mode<synchronous>, transform_indices = @transform_1, window_bounds = array<i64: 48, 8>}, {pipeline_mode = #tpu.pipeline_mode<synchronous>, transform_indices = @transform_2, window_bounds = array<i64: 48, 1>}, {pipeline_mode = #tpu.pipeline_mode<synchronous>, transform_indices = @transform_3, window_bounds = array<i64: 48, 1>}, {transform_indices = @transform_4, window_bounds = array<i64: 1, 1, 48, 16>}]} {
    %c0 = arith.constant 0 : index
    %c0_0 = arith.constant 0 : index
    %0 = vector.load %arg4[%c0, %c0_0] : memref<48x8xf32, #tpu.memory_space<vmem>>, vector<48x8xf32>
    %c0_1 = arith.constant 0 : index
    %c0_2 = arith.constant 0 : index
    %c0_3 = arith.constant 0 : index
    %c0_4 = arith.constant 0 : index
    %1 = vector.load %arg3[%c0_1, %c0_2, %c0_3, %c0_4] : memref<1x1x8x16xf32, #tpu.memory_space<vmem>>, vector<1x1x8x16xf32>
    %2 = vector.shape_cast %1 : vector<1x1x8x16xf32> to vector<8x16xf32>
    %cst = arith.constant dense<0.000000e+00> : vector<48x16xf32>
    %3 = tpu.matmul %0, %2, %cst {dimension_numbers = #tpu.dot_dimension_numbers<[1], [0], [0], [1], [0, 0, 1, 1], [], []>} : vector<48x8xf32>, vector<8x16xf32>, vector<48x16xf32> -> vector<48x16xf32>
    %c0_5 = arith.constant 0 : index
    %c0_6 = arith.constant 0 : index
    %4 = vector.load %arg5[%c0_5, %c0_6] : memref<48x1xf32, #tpu.memory_space<vmem>>, vector<48x1xf32>
    %5 = vector.broadcast %4 : vector<48x1xf32> to vector<48x16xf32>
    %6 = arith.mulf %3, %5 : vector<48x16xf32>
    %c0_7 = arith.constant 0 : index
    %c0_8 = arith.constant 0 : index
    %7 = vector.load %arg6[%c0_7, %c0_8] : memref<48x1xf32, #tpu.memory_space<vmem>>, vector<48x1xf32>
    %8 = vector.broadcast %7 : vector<48x1xf32> to vector<48x16xf32>
    %9 = arith.addf %6, %8 : vector<48x16xf32>
    %cst_9 = arith.constant 0.000000e+00 : f32
    %10 = vector.broadcast %cst_9 : f32 to vector<48x16xf32>
    %11 = arith.maximumf %9, %10 : vector<48x16xf32>
    %c0_10 = arith.constant 0 : index
    %c0_11 = arith.constant 0 : index
    %c0_12 = arith.constant 0 : index
    %c0_13 = arith.constant 0 : index
    %12 = vector.load %arg7[%c0_10, %c0_11, %c0_12, %c0_13] : memref<1x1x48x16xf32, #tpu.memory_space<vmem>>, vector<1x1x48x16xf32>
    %13 = vector.shape_cast %12 : vector<1x1x48x16xf32> to vector<48x16xf32>
    %14 = vector.shape_cast %11 : vector<48x16xf32> to vector<1x1x48x16xf32>
    tpu.vector_store %arg7[%c0_10, %c0_11, %c0_12, %c0_13], %14 {strides = array<i32>} : memref<1x1x48x16xf32, #tpu.memory_space<vmem>>, vector<1x1x48x16xf32>,
    return
  }
  func.func @transform_0(%arg0: i32, %arg1: i32, %arg2: i32) -> (i32, i32, i32, i32) {
    %c0_i32 = arith.constant 0 : i32
    %c0_i32_0 = arith.constant 0 : i32
    return %arg0, %arg1, %c0_i32, %arg2 : i32, i32, i32, i32
  }
  func.func @transform_1(%arg0: i32, %arg1: i32, %arg2: i32) -> (i32, i32) {
    %c0_i32 = arith.constant 0 : i32
    %c0_i32_0 = arith.constant 0 : i32
    %c0_i32_1 = arith.constant 0 : i32
    return %c0_i32, %c0_i32_0 : i32, i32
  }
  func.func @transform_2(%arg0: i32, %arg1: i32, %arg2: i32) -> (i32, i32) {
    %c0_i32 = arith.constant 0 : i32
    %c0_i32_0 = arith.constant 0 : i32
    %c0_i32_1 = arith.constant 0 : i32
    return %c0_i32, %c0_i32_0 : i32, i32
  }
  func.func @transform_3(%arg0: i32, %arg1: i32, %arg2: i32) -> (i32, i32) {
    %c0_i32 = arith.constant 0 : i32
    %c0_i32_0 = arith.constant 0 : i32
    %c0_i32_1 = arith.constant 0 : i32
    return %c0_i32, %c0_i32_0 : i32, i32
  }
  func.func @transform_4(%arg0: i32, %arg1: i32, %arg2: i32) -> (i32, i32, i32, i32) {
    %c0_i32 = arith.constant 0 : i32
    %c0_i32_0 = arith.constant 0 : i32
    return %arg0, %arg1, %c0_i32, %arg2 : i32, i32, i32, i32
  }
}

</mosaic_0001>

<llo_original>
// kernel: tpu_custom_call.1
$region0: #{tpu_custom_call.1}
  #allocation0 [shape = 'u32[]', space=smem, size = 0x4, offset = 0x4, fixed_abs, tag = 'smem constant byte address 0x4 - core index']
  #allocation1 [shape = 'u32[144,128]{1,0:T(1,128)}', space=vmem, size = 0x12000, scoped, tag = 'internal scratch']
  %s0 = inlined_call_operand.vmem [shape: f32[2,3,8,16], index: 0, kind: input, shape index: {}]
  %s1 = inlined_call_operand.vmem [shape: f32[48,8], index: 1, kind: input, shape index: {}]
  %s2 = inlined_call_operand.vmem [shape: f32[48,1], index: 2, kind: input, shape index: {}]
  %s3 = inlined_call_operand.vmem [shape: f32[48,1], index: 3, kind: input, shape index: {}]
  %s4 = inlined_call_operand.vmem [shape: f32[2,3,48,16], index: 4, kind: output, shape index: {}]
  %s5 = sld [smem:[#allocation0]]
  $region49: #{tpu_custom_call.1} parent=0
    _
  %s7 = ssub.s32 1, %s5
  %s8 = scalar_select 0, %s7, %s5
  loop: start=0, step=1, limit=8
  $region2: #{tpu_custom_call.1} parent=0 // loop_pre_header
    _
  $region3: #{tpu_custom_call.1} parent=0 // loop_header
    %s10 = sphi 0, %s14
    %p11 = scmp.ge.s32.totalorder %s10, 8
    %s17 = sphi 0, %s36
    %s18 = sphi 0, %s32
    %s19 = sphi 0, %s28
    %s20 = sphi 0, %s17
    %s21 = sphi 0, %s18
    %s22 = sphi 0, %s19
    %s23 = sphi 0, %s20
    %s24 = sphi 0, %s21
    %s25 = sphi 0, %s22
    %s43 = sphi 0, %s45
    %s46 = sphi 0, %s43
    %s47 = sphi 0, %s46
    %s63 = sphi 0, %s47
    %s67 = sphi 0, %s67
    %s69 = sphi 0, %s67
    %s70 = sphi 0, %s69
    %s84 = sphi 0, %s70
    %s88 = sphi 0, %s88
    %s90 = sphi 0, %s88
    %s91 = sphi 0, %s90
    %s105 = sphi 0, %s91
    %s109 = sphi 0, %s109
    %s111 = sphi 0, %s109
    %s112 = sphi 0, %s111
    %s126 = sphi 0, %s112
    %s136 = sphi 0, %s138
    %s139 = sphi 0, %s136
    %s140 = sphi 0, %s139
    %s156 = sphi 0, %s140
  $region4: #{tpu_custom_call.1} parent=0 // loop_header_branch
    %13 = sbr.rel (%p11) target = $region8
  $region5: #{tpu_custom_call.1} parent=0 // loop_body
    %s15 = ssub.s32 %s10, 1
    %s16 = ssub.s32 %s10, 2
    %s26 = sadd.s32 1, %s19
    %p27 = scmp.ge.s32.totalorder %s26, 1
    %s28 = scalar_select %p27, 0, %s26
    %s29 = sadd.s32 1, %s18
    %s30 = scalar_select %p27, %s29, %s18
    %p31 = scmp.ge.s32.totalorder %s30, 3
    %s32 = scalar_select %p31, 0, %s30
    %s33 = sadd.s32 1, %s17
    %s34 = scalar_select %p31, %s33, %s17
    %p35 = scmp.ge.s32.totalorder %s34, 2
    %s36 = scalar_select %p35, 0, %s34
    %s37 = ssub.s32 %s17, %s36
    %s38 = ssub.s32 %s18, %s32
    %s39 = sor.u32 %s37, %s38
    %s40 = ssub.s32 %s19, %s28
    %s41 = sor.u32 %s39, %s40
    %p42 = scmp.eq.s32.totalorder %s41, 0
    %s44 = sadd.s32 %s43, 1
    %s45 = scalar_select %p42, %s43, %s44
    %p48 = pneg %p42
    %p49 = scmp.eq.s32.totalorder %s10, 5
    %p50 = por %p48, %p49
    %p51 = scmp.ne.s32.totalorder %s43, %s46
    %p52 = scmp.eq.s32.totalorder %s10, 0
    %p53 = por %p51, %p52
    %p54 = scmp.ne.s32.totalorder %s43, %s46
    %p55 = scmp.eq.s32.totalorder %s15, 5
    %p56 = por %p54, %p55
    %p57 = scmp.ne.s32.totalorder %s46, %s47
    %p58 = scmp.eq.s32.totalorder %s15, 0
    %p59 = por %p57, %p58
    %p60 = scmp.ne.s32.totalorder %s46, %s47
    %p61 = scmp.eq.s32.totalorder %s16, 5
    %p62 = por %p60, %p61
    %p64 = scmp.ne.s32.totalorder %s47, %s63
    %p65 = scmp.eq.s32.totalorder %s16, 0
    %p66 = por %p64, %p65
    %s68 = sadd.s32 %s67, 1
    %p71 = scmp.eq.s32.totalorder %s10, 5
    %p72 = scmp.ne.s32.totalorder %s67, %s69
    %p73 = scmp.eq.s32.totalorder %s10, 0
    %p74 = por %p72, %p73
    %p75 = scmp.ne.s32.totalorder %s67, %s69
    %p76 = scmp.eq.s32.totalorder %s15, 5
    %p77 = por %p75, %p76
    %p78 = scmp.ne.s32.totalorder %s69, %s70
    %p79 = scmp.eq.s32.totalorder %s15, 0
    %p80 = por %p78, %p79
    %p81 = scmp.ne.s32.totalorder %s69, %s70
    %p82 = scmp.eq.s32.totalorder %s16, 5
    %p83 = por %p81, %p82
    %p85 = scmp.ne.s32.totalorder %s70, %s84
    %p86 = scmp.eq.s32.totalorder %s16, 0
    %p87 = por %p85, %p86
    %s89 = sadd.s32 %s88, 1
    %p92 = scmp.eq.s32.totalorder %s10, 5
    %p93 = scmp.ne.s32.totalorder %s88, %s90
    %p94 = scmp.eq.s32.totalorder %s10, 0
    %p95 = por %p93, %p94
    %p96 = scmp.ne.s32.totalorder %s88, %s90
    %p97 = scmp.eq.s32.totalorder %s15, 5
    %p98 = por %p96, %p97
    %p99 = scmp.ne.s32.totalorder %s90, %s91
    %p100 = scmp.eq.s32.totalorder %s15, 0
    %p101 = por %p99, %p100
    %p102 = scmp.ne.s32.totalorder %s90, %s91
    %p103 = scmp.eq.s32.totalorder %s16, 5
    %p104 = por %p102, %p103
    %p106 = scmp.ne.s32.totalorder %s91, %s105
    %p107 = scmp.eq.s32.totalorder %s16, 0
    %p108 = por %p106, %p107
    %s110 = sadd.s32 %s109, 1
    %p113 = scmp.eq.s32.totalorder %s10, 5
    %p114 = scmp.ne.s32.totalorder %s109, %s111
    %p115 = scmp.eq.s32.totalorder %s10, 0
    %p116 = por %p114, %p115
    %p117 = scmp.ne.s32.totalorder %s109, %s111
    %p118 = scmp.eq.s32.totalorder %s15, 5
    %p119 = por %p117, %p118
    %p120 = scmp.ne.s32.totalorder %s111, %s112
    %p121 = scmp.eq.s32.totalorder %s15, 0
    %p122 = por %p120, %p121
    %p123 = scmp.ne.s32.totalorder %s111, %s112
    %p124 = scmp.eq.s32.totalorder %s16, 5
    %p125 = por %p123, %p124
    %p127 = scmp.ne.s32.totalorder %s112, %s126
    %p128 = scmp.eq.s32.totalorder %s16, 0
    %p129 = por %p127, %p128
    %s130 = ssub.s32 %s17, %s36
    %s131 = ssub.s32 %s18, %s32
    %s132 = sor.u32 %s130, %s131
    %s133 = ssub.s32 %s19, %s28
    %s134 = sor.u32 %s132, %s133
    %p135 = scmp.eq.s32.totalorder %s134, 0
    %s137 = sadd.s32 %s136, 1
    %s138 = scalar_select %p135, %s136, %s137
    %p141 = pneg %p135
    %p142 = scmp.eq.s32.totalorder %s10, 5
    %p143 = por %p141, %p142
    %p144 = scmp.ne.s32.totalorder %s136, %s139
    %p145 = scmp.eq.s32.totalorder %s10, 0
    %p146 = por %p144, %p145
    %p147 = scmp.ne.s32.totalorder %s136, %s139
    %p148 = scmp.eq.s32.totalorder %s15, 5
    %p149 = por %p147, %p148
    %p150 = scmp.ne.s32.totalorder %s139, %s140
    %p151 = scmp.eq.s32.totalorder %s15, 0
    %p152 = por %p150, %p151
    %p153 = scmp.ne.s32.totalorder %s139, %s140
    %p154 = scmp.eq.s32.totalorder %s16, 5
    %p155 = por %p153, %p154
    %p157 = scmp.ne.s32.totalorder %s140, %s156
    %p158 = scmp.eq.s32.totalorder %s16, 0
    %p159 = por %p157, %p158
    %p160 = scmp.le.s32.totalorder 1, %s10
    %p161 = scmp.lt.s32.totalorder %s10, 7
    %p162 = pnand %p160, %p161
    %p163 = pneg %p162
    // Predicated region
    $region9: #{tpu_custom_call.1} parent=5 // pred_check
      _
    $region10: #{tpu_custom_call.1} parent=5 // pred_check_branch
      %165 = sbr.rel (%p162) target = $region12
    $region11: #{tpu_custom_call.1} parent=5 // pred_region
      %s166 = ssub.s32 %s10, 1
      // Predicated region
      $region13: #{tpu_custom_call.1} parent=11 // pred_check
        %p167 = pneg %p80
      $region14: #{tpu_custom_call.1} parent=11 // pred_check_branch
        %169 = sbr.rel (%p167) target = $region16
      $region15: #{tpu_custom_call.1} parent=11 // pred_region
        _
      $region16: #{tpu_custom_call.1} parent=11 // pred_fallthru
        _
      // Predicated region
      $region17: #{tpu_custom_call.1} parent=11 // pred_check
        %p170 = pneg %p101
      $region18: #{tpu_custom_call.1} parent=11 // pred_check_branch
        %172 = sbr.rel (%p170) target = $region20
      $region19: #{tpu_custom_call.1} parent=11 // pred_region
        _
      $region20: #{tpu_custom_call.1} parent=11 // pred_fallthru
        _
      // Predicated region
      $region21: #{tpu_custom_call.1} parent=11 // pred_check
        %p173 = pneg %p122
      $region22: #{tpu_custom_call.1} parent=11 // pred_check_branch
        %175 = sbr.rel (%p173) target = $region24
      $region23: #{tpu_custom_call.1} parent=11 // pred_region
        _
      $region24: #{tpu_custom_call.1} parent=11 // pred_fallthru
        _
    $region12: #{tpu_custom_call.1} parent=5 // pred_fallthru
      _
    %p176 = scmp.lt.s32.totalorder %s10, 6
    // Predicated region
    $region25: #{tpu_custom_call.1} parent=5 // pred_check
      %p177 = pneg %p176
    $region26: #{tpu_custom_call.1} parent=5 // pred_check_branch
      %179 = sbr.rel (%p177) target = $region28
    $region27: #{tpu_custom_call.1} parent=5 // pred_region
      // Predicated region
      $region29: #{tpu_custom_call.1} parent=27 // pred_check
        %p180 = pneg %p53
      $region30: #{tpu_custom_call.1} parent=27 // pred_check_branch
        %182 = sbr.rel (%p180) target = $region32
      $region31: #{tpu_custom_call.1} parent=27 // pred_region
        %p183 = scmp.lt.s32.totalorder %s17, 1
        %s184 = scalar_select %p183, %s17, 1
        %p185 = scmp.lt.s32.totalorder %s18, 2
        %s186 = scalar_select %p185, %s18, 2
        %p187 = scmp.lt.s32.totalorder %s19, 0
        %s188 = scalar_select %p187, %s19, 0
        %s189 = sadd.s32 %s188, %s186
        %s190 = smul.addr %s184, 3
        %s191 = sadd.s32 %s189, %s190
        %s192 = smul.addr %s191, 8
        %s193 = scalar_lea.vmem %s0, %s192
      $region32: #{tpu_custom_call.1} parent=27 // pred_fallthru
        _
    $region28: #{tpu_custom_call.1} parent=5 // pred_fallthru
      _
    %p194 = scmp.le.s32.totalorder 1, %s10
    %p195 = scmp.lt.s32.totalorder %s10, 7
    %p196 = pnand %p194, %p195
    %p197 = pneg %p196
    // Predicated region
    $region33: #{tpu_custom_call.1} parent=5 // pred_check
      _
    $region34: #{tpu_custom_call.1} parent=5 // pred_check_branch
      %199 = sbr.rel (%p196) target = $region36
    $region35: #{tpu_custom_call.1} parent=5 // pred_region
      %s200 = ssub.s32 %s10, 1
      %p201 = scmp.lt.s32.totalorder %s20, 1
      %s202 = scalar_select %p201, %s20, 1
      %p203 = scmp.lt.s32.totalorder %s21, 2
      %s204 = scalar_select %p203, %s21, 2
      %p205 = scmp.lt.s32.totalorder %s22, 0
      %s206 = scalar_select %p205, %s22, 0
      %s207 = sadd.s32 %s206, %s204
      %s208 = smul.addr %s202, 3
      %s209 = sadd.s32 %s207, %s208
      %s210 = smul.addr %s209, 8
      %s211 = scalar_lea.vmem %s0, %s210
      %p212 = pneg %p59
      %p213 = pneg %p56
      %p214 = pneg %p80
      %p215 = pneg %p77
      %p216 = pneg %p101
      %p217 = pneg %p98
      %p218 = pneg %p122
      %p219 = pneg %p119
      %p220 = pneg %p152
      %p221 = pneg %p149
      %p222 = scmp.lt.s32.totalorder %s20, 1
      %s223 = scalar_select %p222, %s20, 1
      %p224 = scmp.lt.s32.totalorder %s21, 2
      %s225 = scalar_select %p224, %s21, 2
      %p226 = scmp.lt.s32.totalorder %s22, 0
      %s227 = scalar_select %p226, %s22, 0
      %s228 = smul.addr %s225, 6
      %s229 = sadd.s32 %s227, %s228
      %s230 = smul.addr %s223, 18
      %s231 = sadd.s32 %s229, %s230
      %s232 = smul.addr %s231, 8
      %s233 = scalar_lea.vmem %s4, %s232
      %p234 = scmp.lt.s32.totalorder %s20, 1
      %s235 = scalar_select %p234, %s20, 1
      %p236 = scmp.lt.s32.totalorder %s21, 2
      %s237 = scalar_select %p236, %s21, 2
      %p238 = scmp.lt.s32.totalorder %s22, 0
      %s239 = scalar_select %p238, %s22, 0
      %s240 = sadd.s32 %s239, %s237
      %s241 = smul.addr %s235, 3
      %s242 = sadd.s32 %s240, %s241
      %s243 = smul.addr %s242, 8
      %s244 = scalar_lea.vmem %s0, %s243
      %p245 = scmp.lt.s32.totalorder %s20, 1
      %s246 = scalar_select %p245, %s20, 1
      %p247 = scmp.lt.s32.totalorder %s21, 2
      %s248 = scalar_select %p247, %s21, 2
      %p249 = scmp.lt.s32.totalorder %s22, 0
      %s250 = scalar_select %p249, %s22, 0
      %s251 = smul.addr %s248, 6
      %s252 = sadd.s32 %s250, %s251
      %s253 = smul.addr %s246, 18
      %s254 = sadd.s32 %s252, %s253
      %s255 = smul.addr %s254, 8
      %s256 = scalar_lea.vmem %s4, %s255
      %v257 = vld [vmem:[%s1] sm:$0xff]
      %v258 = vld [vmem:[%s1 + $0x8] sm:$0xff]
      %v259 = vld [vmem:[%s1 + $0x10] sm:$0xff]
      %v260 = vld [vmem:[%s1 + $0x18] sm:$0xff]
      %v261 = vld [vmem:[%s1 + $0x20] sm:$0xff]
      %v262 = vld [vmem:[%s1 + $0x28] sm:$0xff]
      %v263 = vld [vmem:[%s244] sm:$0xff]
      %vm264 = vcmask 64512
      %v266 = vsel %vm264, %v257, 0
      %v269 = vsel %vm264, %v258, 0
      %v272 = vsel %vm264, %v259, 0
      %v275 = vsel %vm264, %v260, 0
      %v278 = vsel %vm264, %v261, 0
      %v281 = vsel %vm264, %v262, 0
      %283 = vmatprep.subr.mxu0 0.0
      %284 = vmatpush1.msra.mxu0 %v263
      %285 = vmatprep.subr.mxu0 0.0
      %286 = vmatpush1.msra.mxu0 0.0
      %287 = vmatprep.subr.mxu0 0.0
      %288 = vmatpush1.msra.mxu0 0.0
      %289 = vmatprep.subr.mxu0 0.0
      %290 = vmatpush1.msra.mxu0 0.0
      %291 = vmatprep.subr.mxu0 0.0
      %292 = vmatpush1.msra.mxu0 0.0
      %293 = vmatprep.subr.mxu0 0.0
      %294 = vmatpush1.msra.mxu0 0.0
      %295 = vmatprep.subr.mxu0 0.0
      %296 = vmatpush1.msra.mxu0 0.0
      %297 = vmatprep.subr.mxu0 0.0
      %298 = vmatpush1.msra.mxu0 0.0
      %299 = vmatprep.subr.mxu0 0.0
      %300 = vmatpush1.msra.mxu0 0.0
      %301 = vmatprep.subr.mxu0 0.0
      %302 = vmatpush1.msra.mxu0 0.0
      %303 = vmatprep.subr.mxu0 0.0
      %304 = vmatpush1.msra.mxu0 0.0
      %305 = vmatprep.subr.mxu0 0.0
      %306 = vmatpush1.msra.mxu0 0.0
      %307 = vmatprep.subr.mxu0 0.0
      %308 = vmatpush1.msra.mxu0 0.0
      %309 = vmatprep.subr.mxu0 0.0
      %310 = vmatpush1.msra.mxu0 0.0
      %311 = vmatprep.subr.mxu0 0.0
      %312 = vmatpush1.msra.mxu0 0.0
      %313 = vmatprep.subr.mxu0 0.0
      %314 = vmatpush1.msra.mxu0 0.0
      %315 = vmatprep.subr.mxu0 0.0
      %316 = vmatpush1.msra.mxu0 0.0
      %317 = vmatprep.subr.mxu0 0.0
      %318 = vmatpush1.msra.mxu0 0.0
      %319 = vmatprep.subr.mxu0 0.0
      %320 = vmatpush1.msra.mxu0 0.0
      %321 = vmatprep.subr.mxu0 0.0
      %322 = vmatpush1.msra.mxu0 0.0
      %323 = vmatprep.subr.mxu0 0.0
      %324 = vmatpush1.msra.mxu0 0.0
      %325 = vmatprep.subr.mxu0 0.0
      %326 = vmatpush1.msra.mxu0 0.0
      %327 = vmatprep.subr.mxu0 0.0
      %328 = vmatpush1.msra.mxu0 0.0
      %329 = vmatprep.subr.mxu0 0.0
      %330 = vmatpush1.msra.mxu0 0.0
      %331 = vmatprep.subr.mxu0 0.0
      %332 = vmatpush1.msra.mxu0 0.0
      %333 = vmatprep.subr.mxu0 0.0
      %334 = vmatpush1.msra.mxu0 0.0
      %335 = vmatprep.subr.mxu0 0.0
      %336 = vmatpush1.msra.mxu0 0.0
      %337 = vmatprep.subr.mxu0 0.0
      %338 = vmatpush1.msra.mxu0 0.0
      %339 = vmatprep.subr.mxu0 0.0
      %340 = vmatpush1.msra.mxu0 0.0
      %341 = vmatprep.subr.mxu0 0.0
      %342 = vmatpush1.msra.mxu0 0.0
      %343 = vmatprep.subr.mxu0 0.0
      %344 = vmatpush1.msra.mxu0 0.0
      %345 = vmatprep.subr.mxu0 0.0
      %346 = vmatpush1.msra.mxu0 0.0
      %347 = vmatprep.mubr.f32.mxu0 0.0
      %348 = vmatmul.mubr.f32.gmra.mrb[0].mxu0 %v266
      %v349 = vpop.f32.mrb[0].mxu0
      %v350 = vadd.f32 0.0, %v349
      %v351 = vpop.f32.mrb[0].mxu0
      %352 = vmatprep.mubr.f32.mxu0 0.0
      %353 = vmatmul.mubr.f32.gmra.mrb[0].mxu0 %v269
      %v354 = vpop.f32.mrb[0].mxu0
      %v355 = vadd.f32 0.0, %v354
      %v356 = vpop.f32.mrb[0].mxu0
      %357 = vmatprep.mubr.f32.mxu0 0.0
      %358 = vmatmul.mubr.f32.gmra.mrb[0].mxu0 %v272
      %v359 = vpop.f32.mrb[0].mxu0
      %v360 = vadd.f32 0.0, %v359
      %v361 = vpop.f32.mrb[0].mxu0
      %362 = vmatprep.mubr.f32.mxu0 0.0
      %363 = vmatmul.mubr.f32.gmra.mrb[0].mxu0 %v275
      %v364 = vpop.f32.mrb[0].mxu0
      %v365 = vadd.f32 0.0, %v364
      %v366 = vpop.f32.mrb[0].mxu0
      %367 = vmatprep.mubr.f32.mxu0 0.0
      %368 = vmatmul.mubr.f32.gmra.mrb[0].mxu0 %v278
      %v369 = vpop.f32.mrb[0].mxu0
      %v370 = vadd.f32 0.0, %v369
      %v371 = vpop.f32.mrb[0].mxu0
      %372 = vmatprep.mubr.f32.mxu0 0.0
      %373 = vmatmul.mubr.f32.gmra.mrb[0].mxu0 %v281
      %v374 = vpop.f32.mrb[0].mxu0
      %v375 = vadd.f32 0.0, %v374
      %v376 = vpop.f32.mrb[0].mxu0
      %377 = vdwg.mxu0
      %v378 = vld [vmem:[%s2] sm:$0xff]
      %v379 = vld [vmem:[%s2 + $0x8] sm:$0xff]
      %v380 = vld [vmem:[%s2 + $0x10] sm:$0xff]
      %v381 = vld [vmem:[%s2 + $0x18] sm:$0xff]
      %v382 = vld [vmem:[%s2 + $0x20] sm:$0xff]
      %v383 = vld [vmem:[%s2 + $0x28] sm:$0xff]
      %385 = vset.pattern.permute.xlu0 0
      %386 = vperm.xlu0 %385, %v378
      %v387 = vpop.permute.xlu0 %386
      %390 = vset.pattern.permute.xlu0 0
      %391 = vperm.xlu0 %390, %v379
      %v392 = vpop.permute.xlu0 %391
      %395 = vset.pattern.permute.xlu0 0
      %396 = vperm.xlu0 %395, %v380
      %v397 = vpop.permute.xlu0 %396
      %400 = vset.pattern.permute.xlu0 0
      %401 = vperm.xlu0 %400, %v381
      %v402 = vpop.permute.xlu0 %401
      %405 = vset.pattern.permute.xlu0 0
      %406 = vperm.xlu0 %405, %v382
      %v407 = vpop.permute.xlu0 %406
      %410 = vset.pattern.permute.xlu0 0
      %411 = vperm.xlu0 %410, %v383
      %v412 = vpop.permute.xlu0 %411
      %v414 = vmul.f32 %v350, %v387
      %v415 = vmul.f32 %v355, %v392
      %v416 = vmul.f32 %v360, %v397
      %v417 = vmul.f32 %v365, %v402
      %v418 = vmul.f32 %v370, %v407
      %v419 = vmul.f32 %v375, %v412
      %v420 = vld [vmem:[%s3] sm:$0xff]
      %v421 = vld [vmem:[%s3 + $0x8] sm:$0xff]
      %v422 = vld [vmem:[%s3 + $0x10] sm:$0xff]
      %v423 = vld [vmem:[%s3 + $0x18] sm:$0xff]
      %v424 = vld [vmem:[%s3 + $0x20] sm:$0xff]
      %v425 = vld [vmem:[%s3 + $0x28] sm:$0xff]
      %427 = vset.pattern.permute.xlu0 0
      %428 = vperm.xlu0 %427, %v420
      %v429 = vpop.permute.xlu0 %428
      %432 = vset.pattern.permute.xlu0 0
      %433 = vperm.xlu0 %432, %v421
      %v434 = vpop.permute.xlu0 %433
      %437 = vset.pattern.permute.xlu0 0
      %438 = vperm.xlu0 %437, %v422
      %v439 = vpop.permute.xlu0 %438
      %442 = vset.pattern.permute.xlu0 0
      %443 = vperm.xlu0 %442, %v423
      %v444 = vpop.permute.xlu0 %443
      %447 = vset.pattern.permute.xlu0 0
      %448 = vperm.xlu0 %447, %v424
      %v449 = vpop.permute.xlu0 %448
      %452 = vset.pattern.permute.xlu0 0
      %453 = vperm.xlu0 %452, %v425
      %v454 = vpop.permute.xlu0 %453
      %v456 = vadd.f32 %v414, %v429
      %v457 = vadd.f32 %v415, %v434
      %v458 = vadd.f32 %v416, %v439
      %v459 = vadd.f32 %v417, %v444
      %v460 = vadd.f32 %v418, %v449
      %v461 = vadd.f32 %v419, %v454
      %v462 = vmax.f32 %v456, 0.0
      %v463 = vmax.f32 %v457, 0.0
      %v464 = vmax.f32 %v458, 0.0
      %v465 = vmax.f32 %v459, 0.0
      %v466 = vmax.f32 %v460, 0.0
      %v467 = vmax.f32 %v461, 0.0
      %vm468 = vcmask 130048
      %469 = vst.msk [vmem:[%s256] sm:$0xff] %vm468, %v462
      %470 = vst.msk [vmem:[%s256 + $0x8] sm:$0xff] %vm468, %v463
      %471 = vst.msk [vmem:[%s256 + $0x10] sm:$0xff] %vm468, %v464
      %472 = vst.msk [vmem:[%s256 + $0x18] sm:$0xff] %vm468, %v465
      %473 = vst.msk [vmem:[%s256 + $0x20] sm:$0xff] %vm468, %v466
      %474 = vst.msk [vmem:[%s256 + $0x28] sm:$0xff] %vm468, %v467
      %p475 = scmp.lt.s32.totalorder %s20, 1
      %s476 = scalar_select %p475, %s20, 1
      %p477 = scmp.lt.s32.totalorder %s21, 2
      %s478 = scalar_select %p477, %s21, 2
      %p479 = scmp.lt.s32.totalorder %s22, 0
      %s480 = scalar_select %p479, %s22, 0
      %s481 = smul.addr %s478, 6
      %s482 = sadd.s32 %s480, %s481
      %s483 = smul.addr %s476, 18
      %s484 = sadd.s32 %s482, %s483
      %s485 = smul.addr %s484, 8
      %s486 = scalar_lea.vmem %s4, %s485
      // Predicated region
      $region37: #{tpu_custom_call.1} parent=35 // pred_check
        %p487 = pneg %p149
      $region38: #{tpu_custom_call.1} parent=35 // pred_check_branch
        %489 = sbr.rel (%p487) target = $region40
      $region39: #{tpu_custom_call.1} parent=35 // pred_region
        _
      $region40: #{tpu_custom_call.1} parent=35 // pred_fallthru
        _
    $region36: #{tpu_custom_call.1} parent=5 // pred_fallthru
      _
    %p490 = scmp.le.s32.totalorder 2, %s10
    // Predicated region
    $region41: #{tpu_custom_call.1} parent=5 // pred_check
      %p491 = pneg %p490
    $region42: #{tpu_custom_call.1} parent=5 // pred_check_branch
      %493 = sbr.rel (%p491) target = $region44
    $region43: #{tpu_custom_call.1} parent=5 // pred_region
      %s494 = ssub.s32 %s10, 2
      // Predicated region
      $region45: #{tpu_custom_call.1} parent=43 // pred_check
        %p495 = pneg %p155
      $region46: #{tpu_custom_call.1} parent=43 // pred_check_branch
        %497 = sbr.rel (%p495) target = $region48
      $region47: #{tpu_custom_call.1} parent=43 // pred_region
        %p498 = scmp.lt.s32.totalorder %s23, 1
        %s499 = scalar_select %p498, %s23, 1
        %p500 = scmp.lt.s32.totalorder %s24, 2
        %s501 = scalar_select %p500, %s24, 2
        %p502 = scmp.lt.s32.totalorder %s25, 0
        %s503 = scalar_select %p502, %s25, 0
        %s504 = smul.addr %s501, 6
        %s505 = sadd.s32 %s503, %s504
        %s506 = smul.addr %s499, 18
        %s507 = sadd.s32 %s505, %s506
        %s508 = smul.addr %s507, 8
        %s509 = scalar_lea.vmem %s4, %s508
      $region48: #{tpu_custom_call.1} parent=43 // pred_fallthru
        _
    $region44: #{tpu_custom_call.1} parent=5 // pred_fallthru
      _
  $region6: #{tpu_custom_call.1} parent=0 // loop_footer
    %s14 = sadd.s32 1, %s10
  $region7: #{tpu_custom_call.1} parent=0 // loop_footer_branch
    %9 = sbr.rel target = $region3
  $region8: #{tpu_custom_call.1} parent=0 // loop_exit
    _

</llo_original>
